<compile_context>
chip_gen: v6e
topology: v6e:2x2x1
jax: 0.10.0
libtpu: 0.0.40
codegen_flags: <defaults>
</compile_context>

<pallas_src>
import jax
import jax.numpy as jnp
from jax.experimental import pallas as pl
from jax.experimental.pallas import tpu as pltpu

# ---- model / problem sizes (small, consistent with the forward pass) -------
T = 64        # document length in tokens
D_IN = 48     # raw token feature dim (stand-in for wordpiece embeddings)
H = 32        # encoder hidden size
F = 64        # FFNN hidden size for mention / link scorers
S = 8         # padded span slots (rows 0,1,2 = A, B, pronoun; rest padding)
LANES = 2 * F          # 128 -> fused FFNN output is exactly one vreg wide

# packed-parameter slab row layout (rows 0:9H = fused FFNN weight)
_ROW_W_END = 9 * H         # 288
_ROW_BIAS = _ROW_W_END     # [b1 | bp1]
_ROW_WOUT = _ROW_W_END + 1 # [w2^T | wp2^T]
_ROW_BOUT = _ROW_W_END + 2 # lane0 = b2, lane1 = bp2
_ROW_BENC = _ROW_W_END + 3 # lanes 0:H = b_enc
P_ROWS = _ROW_W_END + 8    # 296 rows (8-aligned)

# merged output layout along the lane axis (128 lanes total)
_MS_COL = 3 * H            # lane holding the mention score
_CS_COL = 3 * H + 1        # lane holding the coref (pair) score


# --------------------------- fused forward kernel ---------------------------
def coref_gap_kernel(x_ref, spans_ref, w_enc_ref, p_ref, out_ref):
    # x_ref:[T,D_IN]  spans_ref:[S,2]i32  w_enc_ref:[D_IN,H]  p_ref:[296,128]
    # out_ref:[S,128]
    # ---- 1. encoder: token embeddings stay resident on-chip -----------------
    b_enc = p_ref[_ROW_BENC:_ROW_BENC + 1, 0:H]                      # [1, H]
    emb = jnp.tanh(
        jnp.dot(x_ref[...], w_enc_ref[...],
                preferred_element_type=jnp.float32) + b_enc)         # [T, H]

    # ---- 2. span selection: ONE stacked [3S,T]x[T,H] MXU dot ----------------
    spans = spans_ref[...]                                           # [S, 2]
    starts = spans[:, 0:1]                                           # [S, 1]
    ends = spans[:, 1:2]                                             # [S, 1]
    tok = jax.lax.broadcasted_iota(jnp.int32, (S, T), 1)
    start_oh = (tok == starts).astype(jnp.float32)                   # [S, T]
    end_oh = (tok == ends).astype(jnp.float32)
    inv_len = 1.0 / jnp.maximum(ends - starts + 1, 1).astype(jnp.float32)
    mean_sel = ((tok >= starts) & (tok <= ends)).astype(jnp.float32) * inv_len
    sel = jnp.concatenate([start_oh, end_oh, mean_sel], axis=0)      # [3S, T]
    g_all = jnp.dot(sel, emb, preferred_element_type=jnp.float32)    # [3S, H]
    g_start = g_all[0:S]
    g_end = g_all[S:2 * S]
    g_mean = g_all[2 * S:3 * S]

    # ---- 3. pair rep [S,9H]; its first 3H lanes ARE g_cat -------------------
    gj_s = jnp.broadcast_to(g_start[2:3, :], (S, H))                 # pronoun
    gj_e = jnp.broadcast_to(g_end[2:3, :], (S, H))
    gj_m = jnp.broadcast_to(g_mean[2:3, :], (S, H))
    pair = jnp.concatenate(
        [g_start, g_end, g_mean,                  # g_i  (== g_cat)
         gj_s, gj_e, gj_m,                        # g_j  (pronoun)
         g_start * gj_s, g_end * gj_e, g_mean * gj_m],               # g_i*g_j
        axis=-1)                                                     # [S, 9H]

    # ---- 4. fused mention+pair FFNN: ONE [S,9H]x[9H,2F] dot + ReLU ----------
    h = jnp.maximum(
        jnp.dot(pair, p_ref[0:_ROW_W_END, :],
                preferred_element_type=jnp.float32)
        + p_ref[_ROW_BIAS:_ROW_BIAS + 1, :], 0.0)                    # [S, 2F]

    # ---- 5. score heads: lane reductions on the two halves ------------------
    hw = h * p_ref[_ROW_WOUT:_ROW_WOUT + 1, :]                       # [S, 2F]
    ms = (jnp.sum(hw[:, 0:F], axis=-1, keepdims=True)
          + p_ref[_ROW_BOUT:_ROW_BOUT + 1, 0:1])                     # [S, 1]
    pair_score = (jnp.sum(hw[:, F:2 * F], axis=-1, keepdims=True)
                  + p_ref[_ROW_BOUT:_ROW_BOUT + 1, 1:2])             # [S, 1]
    cs = ms + ms[2:3, :] + pair_score                                # [S, 1]

    # ---- 6. single lane-dense one-vreg store: [g_s|g_e|g_m|ms|cs|0...] ------
    lane = jax.lax.broadcasted_iota(jnp.int32, (S, 128 - 3 * H), 1)
    tail = jnp.where(lane == 0, ms, jnp.where(lane == 1, cs, 0.0))
    out_ref[...] = jnp.concatenate([g_start, g_end, g_mean, tail], axis=-1)


# ------------------------------- wrappers ------------------------------------
def pack_params(params):
    """Pack all FFNN weights / biases / heads into one [296,128] f32 slab."""
    wf = jnp.zeros((9 * H, LANES), jnp.float32)
    wf = wf.at[:3 * H, :F].set(params["w1"])          # mention FFNN (cols 0:F)
    wf = wf.at[:, F:].set(params["wp1"])              # pair FFNN    (cols F:2F)
    row_bias = jnp.concatenate([params["b1"], params["bp1"]], axis=-1)
    row_wout = jnp.concatenate(
        [params["w2"].reshape(1, F), params["wp2"].reshape(1, F)], axis=-1)
    row_bout = jnp.zeros((1, LANES), jnp.float32)
    row_bout = row_bout.at[0, 0].set(params["b2"][0, 0])
    row_bout = row_bout.at[0, 1].set(params["bp2"][0, 0])
    row_benc = jnp.zeros((1, LANES), jnp.float32)
    row_benc = row_benc.at[0, :H].set(params["b_enc"][0])
    pad = jnp.zeros((P_ROWS - _ROW_W_END - 4, LANES), jnp.float32)
    return jnp.concatenate(
        [wf, row_bias, row_wout, row_bout, row_benc, pad], axis=0)


def coref_scorer_gap_batch(x, spans, params):
    """Batched forward.  x: [B,T,D_IN] f32, spans: [B,S,2] i32 (A,B,pron,...)."""
    B = x.shape[0]
    pslab = pack_params(params)

    flops = 2 * B * (T * D_IN * H + 3 * S * T * H + S * 9 * H * LANES)
    bytes_accessed = 4 * (x.size + spans.size + params["w_enc"].size
                          + pslab.size + B * S * LANES)

    out = pl.pallas_call(
        coref_gap_kernel,
        out_shape=jax.ShapeDtypeStruct((B, S, LANES), jnp.float32),
        grid=(B,),
        in_specs=[
            pl.BlockSpec((None, T, D_IN), lambda b: (b, 0, 0)),    # per-example
            pl.BlockSpec((None, S, 2), lambda b: (b, 0, 0)),       # per-example
            pl.BlockSpec((D_IN, H), lambda b: (0, 0)),             # resident
            pl.BlockSpec((P_ROWS, LANES), lambda b: (0, 0)),       # resident
        ],
        out_specs=pl.BlockSpec((None, S, LANES), lambda b: (b, 0, 0)),
        compiler_params=pltpu.CompilerParams(
            dimension_semantics=("parallel",)),
        cost_estimate=pl.CostEstimate(
            flops=flops, transcendentals=B * T * H,
            bytes_accessed=bytes_accessed),
    )(x, spans, params["w_enc"], pslab)

    g = out[:, :3, :3 * H]                            # span representations
    mention_scores = out[:, :3, _MS_COL:_MS_COL + 1]
    coref_scores = out[:, :2, _CS_COL:_CS_COL + 1]    # (A,pron), (B,pron)
    return g, mention_scores, coref_scores


def coref_scorer_gap(x, a_span, b_span, pronoun_span, params):
    """Single-example convenience wrapper (keeps the original API)."""
    spans = [list(a_span), list(b_span), list(pronoun_span)]
    spans += [[0, 0]] * (S - 3)
    spans = jnp.array(spans, jnp.int32)[None]         # [1, S, 2]
    g, ms, cs = coref_scorer_gap_batch(x[None], spans, params)
    return g[0], ms[0], cs[0]


# --------------------- pure-JAX reference for checking -----------------------
def reference(x, a_span, b_span, pronoun_span, params):
    emb = jnp.tanh(x @ params["w_enc"] + params["b_enc"])

    def span_rep(s, e):
        return jnp.concatenate([emb[s], emb[e], emb[s:e + 1].mean(axis=0)])

    g = jnp.stack([span_rep(*a_span), span_rep(*b_span),
                   span_rep(*pronoun_span)])                       # [3, 3H]
    h = jnp.maximum(g @ params["w1"] + params["b1"], 0.0)
    ms = h @ params["w2"] + params["b2"]                           # [3, 1]

    gi = g[:2]
    gj = jnp.broadcast_to(g[2:3], (2, 3 * H))
    pair = jnp.concatenate([gi, gj, gi * gj], axis=-1)             # [2, 9H]
    hp = jnp.maximum(pair @ params["wp1"] + params["bp1"], 0.0)
    cs = ms[:2] + ms[2:3] + hp @ params["wp2"] + params["bp2"]     # [2, 1]
    return g, ms, cs


def init_params(key):
    ks = jax.random.split(key, 8)
    scale = lambda fan_in: 1.0 / jnp.sqrt(jnp.float32(fan_in))
    return {
        "w_enc": jax.random.normal(ks[0], (D_IN, H), jnp.float32) * scale(D_IN),
        "b_enc": jnp.zeros((1, H), jnp.float32),
        "w1": jax.random.normal(ks[1], (3 * H, F), jnp.float32) * scale(3 * H),
        "b1": jnp.zeros((1, F), jnp.float32),
        "w2": jax.random.normal(ks[2], (F, 1), jnp.float32) * scale(F),
        "b2": jnp.zeros((1, 1), jnp.float32),
        "wp1": jax.random.normal(ks[3], (9 * H, F), jnp.float32) * scale(9 * H),
        "bp1": jnp.zeros((1, F), jnp.float32),
        "wp2": jax.random.normal(ks[4], (F, 1), jnp.float32) * scale(F),
        "bp2": jnp.zeros((1, 1), jnp.float32),
    }


if __name__ == "__main__":
    key = jax.random.PRNGKey(0)
    k_x, k_p = jax.random.split(key)
    B = 4
    x = jax.random.normal(k_x, (B, T, D_IN), jnp.float32)   # batched docs
    params = init_params(k_p)

    # (A, B, pronoun) inclusive token spans per example
    span_sets = [
        ((4, 6), (10, 13), (20, 20)),
        ((0, 2), (30, 35), (40, 40)),
        ((7, 7), (18, 22), (55, 55)),
        ((12, 15), (44, 47), (3, 3)),
    ]
    spans = jnp.array(
        [[list(a), list(b), list(p)] + [[0, 0]] * (S - 3)
         for a, b, p in span_sets], jnp.int32)               # [B, S, 2]

    g, mention_scores, coref_scores = jax.block_until_ready(
        coref_scorer_gap_batch(x, spans, params))

    for bi, (a, b, p) in enumerate(span_sets):
        g_ref, ms_ref, cs_ref = reference(x[bi], a, b, p, params)
        assert jnp.allclose(g[bi], g_ref, atol=2e-3, rtol=2e-3)
        assert jnp.allclose(mention_scores[bi], ms_ref, atol=2e-3, rtol=2e-3)
        assert jnp.allclose(coref_scores[bi], cs_ref, atol=2e-3, rtol=2e-3)
    print("KERNEL_OK")
</pallas_src>

<mosaic_0001>
module attributes {stable_mosaic.version = 11 : i64} {
  func.func @coref_gap_kernel(%arg0: i32, %arg1: memref<1x64x48xf32, #tpu.memory_space<vmem>>, %arg2: memref<1x8x2xi32, #tpu.memory_space<vmem>>, %arg3: memref<48x32xf32, #tpu.memory_space<vmem>>, %arg4: memref<296x128xf32, #tpu.memory_space<vmem>>, %arg5: memref<1x8x128xf32, #tpu.memory_space<vmem>>) attributes {dimension_semantics = [#tpu.dimension_semantics<parallel>], iteration_bounds = array<i64: 4>, scalar_prefetch = 0 : i64, scratch_operands = 0 : i64, tpu.core_type = #tpu.core_type<tc>, window_params = [{transform_indices = @transform_0, window_bounds = array<i64: 1, 64, 48>}, {transform_indices = @transform_1, window_bounds = array<i64: 1, 8, 2>}, {pipeline_mode = #tpu.pipeline_mode<synchronous>, transform_indices = @transform_2, window_bounds = array<i64: 48, 32>}, {pipeline_mode = #tpu.pipeline_mode<synchronous>, transform_indices = @transform_3, window_bounds = array<i64: 296, 128>}, {transform_indices = @transform_4, window_bounds = array<i64: 1, 8, 128>}]} {
    %c291 = arith.constant 291 : index
    %c0 = arith.constant 0 : index
    %0 = vector.load %arg4[%c291, %c0] : memref<296x128xf32, #tpu.memory_space<vmem>>, vector<1x32xf32>
    %c0_0 = arith.constant 0 : index
    %c0_1 = arith.constant 0 : index
    %c0_2 = arith.constant 0 : index
    %1 = vector.load %arg1[%c0_0, %c0_1, %c0_2] : memref<1x64x48xf32, #tpu.memory_space<vmem>>, vector<1x64x48xf32>
    %2 = vector.shape_cast %1 : vector<1x64x48xf32> to vector<64x48xf32>
    %c0_3 = arith.constant 0 : index
    %c0_4 = arith.constant 0 : index
    %3 = vector.load %arg3[%c0_3, %c0_4] : memref<48x32xf32, #tpu.memory_space<vmem>>, vector<48x32xf32>
    %cst = arith.constant dense<0.000000e+00> : vector<64x32xf32>
    %4 = tpu.matmul %2, %3, %cst {dimension_numbers = #tpu.dot_dimension_numbers<[1], [0], [0], [1], [0, 0, 1, 1], [], []>} : vector<64x48xf32>, vector<48x32xf32>, vector<64x32xf32> -> vector<64x32xf32>
    %5 = vector.broadcast %0 : vector<1x32xf32> to vector<64x32xf32>
    %6 = arith.addf %4, %5 : vector<64x32xf32>
    %7 = math.tanh %6 : vector<64x32xf32>
    %c0_5 = arith.constant 0 : index
    %c0_6 = arith.constant 0 : index
    %c0_7 = arith.constant 0 : index
    %8 = vector.load %arg2[%c0_5, %c0_6, %c0_7] : memref<1x8x2xi32, #tpu.memory_space<vmem>>, vector<1x8x2xi32>
    %9 = vector.shape_cast %8 : vector<1x8x2xi32> to vector<8x2xi32>
    %10 = vector.extract_strided_slice %9 {offsets = [0, 0], sizes = [8, 1], strides = [1, 1]} : vector<8x2xi32> to vector<8x1xi32>
    %11 = vector.extract_strided_slice %9 {offsets = [0, 1], sizes = [8, 1], strides = [1, 1]} : vector<8x2xi32> to vector<8x1xi32>
    %12 = tpu.iota {dimensions = array<i32: 1>} : vector<8x64xi32>
    %13 = vector.broadcast %10 : vector<8x1xi32> to vector<8x64xi32>
    %14 = arith.cmpi eq, %12, %13 : vector<8x64xi32>
    %15 = arith.extui %14 : vector<8x64xi1> to vector<8x64xi32>
    %16 = arith.sitofp %15 : vector<8x64xi32> to vector<8x64xf32>
    %17 = vector.broadcast %11 : vector<8x1xi32> to vector<8x64xi32>
    %18 = arith.cmpi eq, %12, %17 : vector<8x64xi32>
    %19 = arith.extui %18 : vector<8x64xi1> to vector<8x64xi32>
    %20 = arith.sitofp %19 : vector<8x64xi32> to vector<8x64xf32>
    %21 = arith.subi %11, %10 : vector<8x1xi32>
    %c1_i32 = arith.constant 1 : i32
    %22 = vector.broadcast %c1_i32 : i32 to vector<8x1xi32>
    %23 = arith.addi %21, %22 : vector<8x1xi32>
    %c1_i32_8 = arith.constant 1 : i32
    %24 = vector.broadcast %c1_i32_8 : i32 to vector<8x1xi32>
    %25 = arith.maxsi %23, %24 : vector<8x1xi32>
    %26 = arith.sitofp %25 : vector<8x1xi32> to vector<8x1xf32>
    %cst_9 = arith.constant 1.000000e+00 : f32
    %27 = vector.broadcast %cst_9 : f32 to vector<8x1xf32>
    %28 = arith.divf %27, %26 : vector<8x1xf32>
    %29 = vector.broadcast %10 : vector<8x1xi32> to vector<8x64xi32>
    %30 = arith.cmpi sge, %12, %29 : vector<8x64xi32>
    %31 = vector.broadcast %11 : vector<8x1xi32> to vector<8x64xi32>
    %32 = arith.cmpi sle, %12, %31 : vector<8x64xi32>
    %33 = arith.andi %30, %32 : vector<8x64xi1>
    %34 = arith.extui %33 : vector<8x64xi1> to vector<8x64xi32>
    %35 = arith.sitofp %34 : vector<8x64xi32> to vector<8x64xf32>
    %36 = vector.broadcast %28 : vector<8x1xf32> to vector<8x64xf32>
    %37 = arith.mulf %35, %36 : vector<8x64xf32>
    %38 = tpu.concatenate %16, %20, %37 in 0 : vector<8x64xf32>, vector<8x64xf32>, vector<8x64xf32> -> vector<24x64xf32>
    %cst_10 = arith.constant dense<0.000000e+00> : vector<24x32xf32>
    %39 = tpu.matmul %38, %7, %cst_10 {dimension_numbers = #tpu.dot_dimension_numbers<[1], [0], [0], [1], [0, 0, 1, 1], [], []>} : vector<24x64xf32>, vector<64x32xf32>, vector<24x32xf32> -> vector<24x32xf32>
    %40 = vector.extract_strided_slice %39 {offsets = [0, 0], sizes = [8, 32], strides = [1, 1]} : vector<24x32xf32> to vector<8x32xf32>
    %41 = vector.extract_strided_slice %39 {offsets = [8, 0], sizes = [8, 32], strides = [1, 1]} : vector<24x32xf32> to vector<8x32xf32>
    %42 = vector.extract_strided_slice %39 {offsets = [16, 0], sizes = [8, 32], strides = [1, 1]} : vector<24x32xf32> to vector<8x32xf32>
    %43 = vector.extract_strided_slice %40 {offsets = [2, 0], sizes = [1, 32], strides = [1, 1]} : vector<8x32xf32> to vector<1x32xf32>
    %44 = vector.shape_cast %43 : vector<1x32xf32> to vector<1x32xf32>
    %45 = vector.broadcast %44 : vector<1x32xf32> to vector<8x32xf32>
    %46 = vector.extract_strided_slice %41 {offsets = [2, 0], sizes = [1, 32], strides = [1, 1]} : vector<8x32xf32> to vector<1x32xf32>
    %47 = vector.shape_cast %46 : vector<1x32xf32> to vector<1x32xf32>
    %48 = vector.broadcast %47 : vector<1x32xf32> to vector<8x32xf32>
    %49 = vector.extract_strided_slice %42 {offsets = [2, 0], sizes = [1, 32], strides = [1, 1]} : vector<8x32xf32> to vector<1x32xf32>
    %50 = vector.shape_cast %49 : vector<1x32xf32> to vector<1x32xf32>
    %51 = vector.broadcast %50 : vector<1x32xf32> to vector<8x32xf32>
    %52 = arith.mulf %40, %45 : vector<8x32xf32>
    %53 = arith.mulf %41, %48 : vector<8x32xf32>
    %54 = arith.mulf %42, %51 : vector<8x32xf32>
    %55 = tpu.concatenate %40, %41, %42, %45, %48, %51, %52, %53, %54 in 1 : vector<8x32xf32>, vector<8x32xf32>, vector<8x32xf32>, vector<8x32xf32>, vector<8x32xf32>, vector<8x32xf32>, vector<8x32xf32>, vector<8x32xf32>, vector<8x32xf32> -> vector<8x288xf32>
    %c0_11 = arith.constant 0 : index
    %c0_12 = arith.constant 0 : index
    %56 = vector.load %arg4[%c0_11, %c0_12] : memref<296x128xf32, #tpu.memory_space<vmem>>, vector<288x128xf32>
    %cst_13 = arith.constant dense<0.000000e+00> : vector<8x128xf32>
    %57 = tpu.matmul %55, %56, %cst_13 {dimension_numbers = #tpu.dot_dimension_numbers<[1], [0], [0], [1], [0, 0, 1, 1], [], []>} : vector<8x288xf32>, vector<288x128xf32>, vector<8x128xf32> -> vector<8x128xf32>
    %c288 = arith.constant 288 : index
    %c0_14 = arith.constant 0 : index
    %58 = vector.load %arg4[%c288, %c0_14] : memref<296x128xf32, #tpu.memory_space<vmem>>, vector<1x128xf32>
    %59 = vector.broadcast %58 : vector<1x128xf32> to vector<8x128xf32>
    %60 = arith.addf %57, %59 : vector<8x128xf32>
    %cst_15 = arith.constant 0.000000e+00 : f32
    %61 = vector.broadcast %cst_15 : f32 to vector<8x128xf32>
    %62 = arith.maximumf %60, %61 : vector<8x128xf32>
    %c289 = arith.constant 289 : index
    %c0_16 = arith.constant 0 : index
    %63 = vector.load %arg4[%c289, %c0_16] : memref<296x128xf32, #tpu.memory_space<vmem>>, vector<1x128xf32>
    %64 = vector.broadcast %63 : vector<1x128xf32> to vector<8x128xf32>
    %65 = arith.mulf %62, %64 : vector<8x128xf32>
    %66 = vector.extract_strided_slice %65 {offsets = [0, 0], sizes = [8, 64], strides = [1, 1]} : vector<8x128xf32> to vector<8x64xf32>
    %cst_17 = arith.constant dense<0.000000e+00> : vector<8xf32>
    %67 = vector.multi_reduction <add>, %66, %cst_17 [1] : vector<8x64xf32> to vector<8xf32>
    %68 = vector.shape_cast %67 : vector<8xf32> to vector<8x1xf32>
    %c290 = arith.constant 290 : index
    %c0_18 = arith.constant 0 : index
    %69 = vector.load %arg4[%c290, %c0_18] : memref<296x128xf32, #tpu.memory_space<vmem>>, vector<1x1xf32>
    %70 = vector.broadcast %69 : vector<1x1xf32> to vector<8x1xf32>
    %71 = arith.addf %68, %70 : vector<8x1xf32>
    %72 = vector.extract_strided_slice %65 {offsets = [0, 64], sizes = [8, 64], strides = [1, 1]} : vector<8x128xf32> to vector<8x64xf32>
    %cst_19 = arith.constant dense<0.000000e+00> : vector<8xf32>
    %73 = vector.multi_reduction <add>, %72, %cst_19 [1] : vector<8x64xf32> to vector<8xf32>
    %74 = vector.shape_cast %73 : vector<8xf32> to vector<8x1xf32>
    %c290_20 = arith.constant 290 : index
    %c1 = arith.constant 1 : index
    %75 = vector.load %arg4[%c290_20, %c1] : memref<296x128xf32, #tpu.memory_space<vmem>>, vector<1x1xf32>
    %76 = vector.broadcast %75 : vector<1x1xf32> to vector<8x1xf32>
    %77 = arith.addf %74, %76 : vector<8x1xf32>
    %78 = vector.extract_strided_slice %71 {offsets = [2, 0], sizes = [1, 1], strides = [1, 1]} : vector<8x1xf32> to vector<1x1xf32>
    %79 = vector.broadcast %78 : vector<1x1xf32> to vector<8x1xf32>
    %80 = arith.addf %71, %79 : vector<8x1xf32>
    %81 = arith.addf %80, %77 : vector<8x1xf32>
    %82 = tpu.iota {dimensions = array<i32: 1>} : vector<8x32xi32>
    %c0_i32 = arith.constant 0 : i32
    %83 = vector.broadcast %c0_i32 : i32 to vector<8x32xi32>
    %84 = arith.cmpi eq, %82, %83 : vector<8x32xi32>
    %c1_i32_21 = arith.constant 1 : i32
    %85 = vector.broadcast %c1_i32_21 : i32 to vector<8x32xi32>
    %86 = arith.cmpi eq, %82, %85 : vector<8x32xi32>
    %cst_22 = arith.constant 0.000000e+00 : f32
    %87 = vector.shape_cast %81 : vector<8x1xf32> to vector<8x1xf32>
    %88 = vector.broadcast %87 : vector<8x1xf32> to vector<8x32xf32>
    %89 = vector.broadcast %cst_22 : f32 to vector<8x32xf32>
    %90 = arith.select %86, %88, %89 : vector<8x32xi1>, vector<8x32xf32>
    %91 = vector.shape_cast %71 : vector<8x1xf32> to vector<8x1xf32>
    %92 = vector.broadcast %91 : vector<8x1xf32> to vector<8x32xf32>
    %93 = arith.select %84, %92, %90 : vector<8x32xi1>, vector<8x32xf32>
    %94 = tpu.concatenate %40, %41, %42, %93 in 1 : vector<8x32xf32>, vector<8x32xf32>, vector<8x32xf32>, vector<8x32xf32> -> vector<8x128xf32>
    %c0_23 = arith.constant 0 : index
    %c0_24 = arith.constant 0 : index
    %c0_25 = arith.constant 0 : index
    %95 = vector.load %arg5[%c0_23, %c0_24, %c0_25] : memref<1x8x128xf32, #tpu.memory_space<vmem>>, vector<1x8x128xf32>
    %96 = vector.shape_cast %95 : vector<1x8x128xf32> to vector<8x128xf32>
    %97 = vector.shape_cast %94 : vector<8x128xf32> to vector<1x8x128xf32>
    tpu.vector_store %arg5[%c0_23, %c0_24, %c0_25], %97 {strides = array<i32>} : memref<1x8x128xf32, #tpu.memory_space<vmem>>, vector<1x8x128xf32>,
    return
  }
  func.func @transform_0(%arg0: i32) -> (i32, i32, i32) {
    %c0_i32 = arith.constant 0 : i32
    %c0_i32_0 = arith.constant 0 : i32
    %c0_i32_1 = arith.constant 0 : i32
    return %arg0, %c0_i32, %c0_i32_0 : i32, i32, i32
  }
  func.func @transform_1(%arg0: i32) -> (i32, i32, i32) {
    %c0_i32 = arith.constant 0 : i32
    %c0_i32_0 = arith.constant 0 : i32
    %c0_i32_1 = arith.constant 0 : i32
    return %arg0, %c0_i32, %c0_i32_0 : i32, i32, i32
  }
  func.func @transform_2(%arg0: i32) -> (i32, i32) {
    %c0_i32 = arith.constant 0 : i32
    %c0_i32_0 = arith.constant 0 : i32
    %c0_i32_1 = arith.constant 0 : i32
    return %c0_i32, %c0_i32_0 : i32, i32
  }
  func.func @transform_3(%arg0: i32) -> (i32, i32) {
    %c0_i32 = arith.constant 0 : i32
    %c0_i32_0 = arith.constant 0 : i32
    %c0_i32_1 = arith.constant 0 : i32
    return %c0_i32, %c0_i32_0 : i32, i32
  }
  func.func @transform_4(%arg0: i32) -> (i32, i32, i32) {
    %c0_i32 = arith.constant 0 : i32
    %c0_i32_0 = arith.constant 0 : i32
    %c0_i32_1 = arith.constant 0 : i32
    return %arg0, %c0_i32, %c0_i32_0 : i32, i32, i32
  }
}

</mosaic_0001>

<llo_original>
// kernel: tpu_custom_call.1
$region0: #{tpu_custom_call.1}
  #allocation0 [shape = 'u32[]', space=smem, size = 0x4, offset = 0x4, fixed_abs, tag = 'smem constant byte address 0x4 - core index']
  #allocation1 [shape = 'u32[144,128]{1,0:T(1,128)}', space=vmem, size = 0x12000, scoped, tag = 'internal scratch']
  %s0 = inlined_call_operand.vmem [shape: f32[4,64,48], index: 0, kind: input, shape index: {}]
  %s1 = inlined_call_operand.vmem [shape: s32[4,8,2], index: 1, kind: input, shape index: {}]
  %s2 = inlined_call_operand.vmem [shape: f32[48,32], index: 2, kind: input, shape index: {}]
  %s3 = inlined_call_operand.vmem [shape: f32[296,128], index: 3, kind: input, shape index: {}]
  %s4 = inlined_call_operand.hbm [shape: f32[4,8,128], index: 4, kind: output, shape index: {}]
  %s5 = sld [smem:[#allocation0]]
  $region49: #{tpu_custom_call.1} parent=0
    _
  %s7 = ssub.s32 1, %s5
  %s8 = scalar_select 0, %s7, %s5
  $region1: #{tpu_custom_call.1} parent=0
    #allocation2 [shape = 'u8[8192]{0}', space=vmem, size = 0x2000, scoped, tag = 'output window, operand 0']
    #allocation3 [shape = 's32[2]{0}', space=sflag, size = 0x8, scoped, tag = 'scoped memory for tpu_custom_call.1']
    %9 = vsyncpa [#allocation3], 0
    %s10 = scalar_lea.sflag [#allocation3], 1
    %11 = vsyncpa %s10, 0
    loop: start=0, step=1, limit=6
    $region2: #{tpu_custom_call.1} parent=1 // loop_pre_header
      _
    $region3: #{tpu_custom_call.1} parent=1 // loop_header
      %s13 = sphi 0, %s17
      %p14 = scmp.ge.s32.totalorder %s13, 6
      %s23 = sphi 0, %s25
      %s26 = sphi 0, %s23
      %s27 = sphi 0, %s26
      %s43 = sphi 0, %s27
      %s49 = sphi 0, %s51
      %s52 = sphi 0, %s49
      %s53 = sphi 0, %s52
      %s69 = sphi 0, %s53
      %s73 = sphi 0, %s73
      %s75 = sphi 0, %s73
      %s76 = sphi 0, %s75
      %s90 = sphi 0, %s76
      %s94 = sphi 0, %s94
      %s96 = sphi 0, %s94
      %s97 = sphi 0, %s96
      %s111 = sphi 0, %s97
      %s117 = sphi 0, %s119
      %s120 = sphi 0, %s117
      %s121 = sphi 0, %s120
      %s137 = sphi 0, %s121
    $region4: #{tpu_custom_call.1} parent=1 // loop_header_branch
      %16 = sbr.rel (%p14) target = $region8
    $region5: #{tpu_custom_call.1} parent=1 // loop_body
      %s18 = ssub.s32 %s13, 1
      %s19 = ssub.s32 %s13, 2
      %s20 = sadd.s32 %s13, 1
      %s21 = ssub.s32 %s13, %s20
      %p22 = scmp.eq.s32.totalorder %s21, 0
      %s24 = sadd.s32 %s23, 1
      %s25 = scalar_select %p22, %s23, %s24
      %p28 = pneg %p22
      %p29 = scmp.eq.s32.totalorder %s13, 3
      %p30 = por %p28, %p29
      %p31 = scmp.ne.s32.totalorder %s23, %s26
      %p32 = scmp.eq.s32.totalorder %s13, 0
      %p33 = por %p31, %p32
      %p34 = scmp.ne.s32.totalorder %s23, %s26
      %p35 = scmp.eq.s32.totalorder %s18, 3
      %p36 = por %p34, %p35
      %p37 = scmp.ne.s32.totalorder %s26, %s27
      %p38 = scmp.eq.s32.totalorder %s18, 0
      %p39 = por %p37, %p38
      %p40 = scmp.ne.s32.totalorder %s26, %s27
      %p41 = scmp.eq.s32.totalorder %s19, 3
      %p42 = por %p40, %p41
      %p44 = scmp.ne.s32.totalorder %s27, %s43
      %p45 = scmp.eq.s32.totalorder %s19, 0
      %p46 = por %p44, %p45
      %s47 = ssub.s32 %s13, %s20
      %p48 = scmp.eq.s32.totalorder %s47, 0
      %s50 = sadd.s32 %s49, 1
      %s51 = scalar_select %p48, %s49, %s50
      %p54 = pneg %p48
      %p55 = scmp.eq.s32.totalorder %s13, 3
      %p56 = por %p54, %p55
      %p57 = scmp.ne.s32.totalorder %s49, %s52
      %p58 = scmp.eq.s32.totalorder %s13, 0
      %p59 = por %p57, %p58
      %p60 = scmp.ne.s32.totalorder %s49, %s52
      %p61 = scmp.eq.s32.totalorder %s18, 3
      %p62 = por %p60, %p61
      %p63 = scmp.ne.s32.totalorder %s52, %s53
      %p64 = scmp.eq.s32.totalorder %s18, 0
      %p65 = por %p63, %p64
      %p66 = scmp.ne.s32.totalorder %s52, %s53
      %p67 = scmp.eq.s32.totalorder %s19, 3
      %p68 = por %p66, %p67
      %p70 = scmp.ne.s32.totalorder %s53, %s69
      %p71 = scmp.eq.s32.totalorder %s19, 0
      %p72 = por %p70, %p71
      %s74 = sadd.s32 %s73, 1
      %p77 = scmp.eq.s32.totalorder %s13, 3
      %p78 = scmp.ne.s32.totalorder %s73, %s75
      %p79 = scmp.eq.s32.totalorder %s13, 0
      %p80 = por %p78, %p79
      %p81 = scmp.ne.s32.totalorder %s73, %s75
      %p82 = scmp.eq.s32.totalorder %s18, 3
      %p83 = por %p81, %p82
      %p84 = scmp.ne.s32.totalorder %s75, %s76
      %p85 = scmp.eq.s32.totalorder %s18, 0
      %p86 = por %p84, %p85
      %p87 = scmp.ne.s32.totalorder %s75, %s76
      %p88 = scmp.eq.s32.totalorder %s19, 3
      %p89 = por %p87, %p88
      %p91 = scmp.ne.s32.totalorder %s76, %s90
      %p92 = scmp.eq.s32.totalorder %s19, 0
      %p93 = por %p91, %p92
      %s95 = sadd.s32 %s94, 1
      %p98 = scmp.eq.s32.totalorder %s13, 3
      %p99 = scmp.ne.s32.totalorder %s94, %s96
      %p100 = scmp.eq.s32.totalorder %s13, 0
      %p101 = por %p99, %p100
      %p102 = scmp.ne.s32.totalorder %s94, %s96
      %p103 = scmp.eq.s32.totalorder %s18, 3
      %p104 = por %p102, %p103
      %p105 = scmp.ne.s32.totalorder %s96, %s97
      %p106 = scmp.eq.s32.totalorder %s18, 0
      %p107 = por %p105, %p106
      %p108 = scmp.ne.s32.totalorder %s96, %s97
      %p109 = scmp.eq.s32.totalorder %s19, 3
      %p110 = por %p108, %p109
      %p112 = scmp.ne.s32.totalorder %s97, %s111
      %p113 = scmp.eq.s32.totalorder %s19, 0
      %p114 = por %p112, %p113
      %s115 = ssub.s32 %s13, %s20
      %p116 = scmp.eq.s32.totalorder %s115, 0
      %s118 = sadd.s32 %s117, 1
      %s119 = scalar_select %p116, %s117, %s118
      %p122 = pneg %p116
      %p123 = scmp.eq.s32.totalorder %s13, 3
      %p124 = por %p122, %p123
      %p125 = scmp.ne.s32.totalorder %s117, %s120
      %p126 = scmp.eq.s32.totalorder %s13, 0
      %p127 = por %p125, %p126
      %p128 = scmp.ne.s32.totalorder %s117, %s120
      %p129 = scmp.eq.s32.totalorder %s18, 3
      %p130 = por %p128, %p129
      %p131 = scmp.ne.s32.totalorder %s120, %s121
      %p132 = scmp.eq.s32.totalorder %s18, 0
      %p133 = por %p131, %p132
      %p134 = scmp.ne.s32.totalorder %s120, %s121
      %p135 = scmp.eq.s32.totalorder %s19, 3
      %p136 = por %p134, %p135
      %p138 = scmp.ne.s32.totalorder %s121, %s137
      %p139 = scmp.eq.s32.totalorder %s19, 0
      %p140 = por %p138, %p139
      %p141 = scmp.le.s32.totalorder 1, %s13
      %p142 = scmp.lt.s32.totalorder %s13, 5
      %p143 = pnand %p141, %p142
      %p144 = pneg %p143
      // Predicated region
      $region9: #{tpu_custom_call.1} parent=5 // pred_check
        _
      $region10: #{tpu_custom_call.1} parent=5 // pred_check_branch
        %146 = sbr.rel (%p143) target = $region12
      $region11: #{tpu_custom_call.1} parent=5 // pred_region
        %s147 = ssub.s32 %s13, 1
        // Predicated region
        $region13: #{tpu_custom_call.1} parent=11 // pred_check
          %p148 = pneg %p86
        $region14: #{tpu_custom_call.1} parent=11 // pred_check_branch
          %150 = sbr.rel (%p148) target = $region16
        $region15: #{tpu_custom_call.1} parent=11 // pred_region
          _
        $region16: #{tpu_custom_call.1} parent=11 // pred_fallthru
          _
        // Predicated region
        $region17: #{tpu_custom_call.1} parent=11 // pred_check
          %p151 = pneg %p107
        $region18: #{tpu_custom_call.1} parent=11 // pred_check_branch
          %153 = sbr.rel (%p151) target = $region20
        $region19: #{tpu_custom_call.1} parent=11 // pred_region
          _
        $region20: #{tpu_custom_call.1} parent=11 // pred_fallthru
          _
      $region12: #{tpu_custom_call.1} parent=5 // pred_fallthru
        _
      %p154 = scmp.lt.s32.totalorder %s13, 4
      // Predicated region
      $region21: #{tpu_custom_call.1} parent=5 // pred_check
        %p155 = pneg %p154
      $region22: #{tpu_custom_call.1} parent=5 // pred_check_branch
        %157 = sbr.rel (%p155) target = $region24
      $region23: #{tpu_custom_call.1} parent=5 // pred_region
        // Predicated region
        $region25: #{tpu_custom_call.1} parent=23 // pred_check
          %p158 = pneg %p33
        $region26: #{tpu_custom_call.1} parent=23 // pred_check_branch
          %160 = sbr.rel (%p158) target = $region28
        $region27: #{tpu_custom_call.1} parent=23 // pred_region
          %p161 = scmp.lt.s32.totalorder %s13, 3
          %s162 = scalar_select %p161, %s13, 3
          %s163 = smul.addr %s162, 8
          %s164 = smul.addr %s163, 8
          %s165 = scalar_lea.vmem %s0, %s164
        $region28: #{tpu_custom_call.1} parent=23 // pred_fallthru
          _
        // Predicated region
        $region29: #{tpu_custom_call.1} parent=23 // pred_check
          %p166 = pneg %p59
        $region30: #{tpu_custom_call.1} parent=23 // pred_check_branch
          %168 = sbr.rel (%p166) target = $region32
        $region31: #{tpu_custom_call.1} parent=23 // pred_region
          %p169 = scmp.lt.s32.totalorder %s13, 3
          %s170 = scalar_select %p169, %s13, 3
          %s171 = smul.addr %s170, 8
          %s172 = scalar_lea.vmem %s1, %s171
        $region32: #{tpu_custom_call.1} parent=23 // pred_fallthru
          _
      $region24: #{tpu_custom_call.1} parent=5 // pred_fallthru
        _
      %p173 = scmp.le.s32.totalorder 1, %s13
      %p174 = scmp.lt.s32.totalorder %s13, 5
      %p175 = pnand %p173, %p174
      %p176 = pneg %p175
      // Predicated region
      $region33: #{tpu_custom_call.1} parent=5 // pred_check
        _
      $region34: #{tpu_custom_call.1} parent=5 // pred_check_branch
        %178 = sbr.rel (%p175) target = $region36
      $region35: #{tpu_custom_call.1} parent=5 // pred_region
        %s179 = ssub.s32 %s13, 1
        %p180 = scmp.lt.s32.totalorder %s18, 3
        %s181 = scalar_select %p180, %s18, 3
        %s182 = smul.addr %s181, 8
        %s183 = smul.addr %s182, 8
        %s184 = scalar_lea.vmem %s0, %s183
        %p185 = pneg %p39
        %p186 = pneg %p36
        %p187 = scmp.lt.s32.totalorder %s18, 3
        %s188 = scalar_select %p187, %s18, 3
        %s189 = smul.addr %s188, 8
        %s190 = scalar_lea.vmem %s1, %s189
        %p191 = pneg %p65
        %p192 = pneg %p62
        %p193 = pneg %p86
        %p194 = pneg %p83
        %p195 = pneg %p107
        %p196 = pneg %p104
        %p197 = pneg %p133
        %p198 = pneg %p130
        %s199 = sand.u32 %s120, 1
        %s200 = scalar_lea.sflag [#allocation3], %s199
        %s201 = sand.u32 %s120, 1
        %s202 = smul.addr %s201, 8
        %s203 = scalar_lea.vmem [#allocation2], %s202
        %p204 = scmp.lt.s32.totalorder %s18, 3
        %s205 = scalar_select %p204, %s18, 3
        %s206 = smul.addr %s205, 8
        %s207 = smul.addr %s206, 8
        %s208 = scalar_lea.vmem %s0, %s207
        %p209 = scmp.lt.s32.totalorder %s18, 3
        %s210 = scalar_select %p209, %s18, 3
        %s211 = smul.addr %s210, 8
        %s212 = scalar_lea.vmem %s1, %s211
        %v213 = vld [vmem:[%s3 + $0x123] sm:$0x1]
        %v214 = vld [vmem:[%s208] sm:$0xff]
        %v215 = vld [vmem:[%s208 + $0x8] sm:$0xff]
        %v216 = vld [vmem:[%s208 + $0x10] sm:$0xff]
        %v217 = vld [vmem:[%s208 + $0x18] sm:$0xff]
        %v218 = vld [vmem:[%s208 + $0x20] sm:$0xff]
        %v219 = vld [vmem:[%s208 + $0x28] sm:$0xff]
        %v220 = vld [vmem:[%s208 + $0x30] sm:$0xff]
        %v221 = vld [vmem:[%s208 + $0x38] sm:$0xff]
        %v222 = vld [vmem:[%s2] sm:$0xff]
        %v223 = vld [vmem:[%s2 + $0x8] sm:$0xff]
        %v224 = vld [vmem:[%s2 + $0x10] sm:$0xff]
        %v225 = vld [vmem:[%s2 + $0x18] sm:$0xff]
        %v226 = vld [vmem:[%s2 + $0x20] sm:$0xff]
        %v227 = vld [vmem:[%s2 + $0x28] sm:$0xff]
        %v228 = vlaneseq
        %v229 = vshrl.u32 %v228, 7
        %v230 = vsub.s32 0, %v229
        %v231 = vrot.slane %v213, %v230
        %vm232 = vcmask 392192
        %v234 = vsel %vm232, %v214, 0
        %v237 = vsel %vm232, %v215, 0
        %v240 = vsel %vm232, %v216, 0
        %v243 = vsel %vm232, %v217, 0
        %v246 = vsel %vm232, %v218, 0
        %v249 = vsel %vm232, %v219, 0
        %v252 = vsel %vm232, %v220, 0
        %v255 = vsel %vm232, %v221, 0
        %257 = vmatprep.subr.mxu0 0.0
        %258 = vmatpush1.msra.mxu0 0.0
        %259 = vmatprep.subr.mxu0 0.0
        %260 = vmatpush1.msra.mxu0 0.0
        %261 = vmatprep.subr.mxu0 0.0
        %262 = vmatpush1.msra.mxu0 0.0
        %263 = vmatprep.subr.mxu0 0.0
        %264 = vmatpush1.msra.mxu0 0.0
        %265 = vmatprep.subr.mxu0 0.0
        %266 = vmatpush1.msra.mxu0 0.0
        %267 = vmatprep.subr.mxu0 0.0
        %268 = vmatpush1.msra.mxu0 0.0
        %269 = vmatprep.subr.mxu0 0.0
        %270 = vmatpush1.msra.mxu0 0.0
        %271 = vmatprep.subr.mxu0 0.0
        %272 = vmatpush1.msra.mxu0 0.0
        %273 = vmatprep.subr.mxu0 0.0
        %274 = vmatpush1.msra.mxu0 0.0
        %275 = vmatprep.subr.mxu0 0.0
        %276 = vmatpush1.msra.mxu0 0.0
        %277 = vmatprep.subr.mxu0 0.0
        %278 = vmatpush1.msra.mxu0 %v227
        %279 = vmatprep.subr.mxu0 0.0
        %280 = vmatpush1.msra.mxu0 %v226
        %281 = vmatprep.subr.mxu0 0.0
        %282 = vmatpush1.msra.mxu0 %v225
        %283 = vmatprep.subr.mxu0 0.0
        %284 = vmatpush1.msra.mxu0 %v224
        %285 = vmatprep.subr.mxu0 0.0
        %286 = vmatpush1.msra.mxu0 %v223
        %287 = vmatprep.subr.mxu0 0.0
        %288 = vmatpush1.msra.mxu0 %v222
        %289 = vmatprep.subr.mxu0 0.0
        %290 = vmatpush2.msra.mxu0 0.0
        %291 = vmatprep.subr.mxu0 0.0
        %292 = vmatpush2.msra.mxu0 0.0
        %293 = vmatprep.subr.mxu0 0.0
        %294 = vmatpush2.msra.mxu0 0.0
        %295 = vmatprep.subr.mxu0 0.0
        %296 = vmatpush2.msra.mxu0 0.0
        %297 = vmatprep.subr.mxu0 0.0
        %298 = vmatpush2.msra.mxu0 0.0
        %299 = vmatprep.subr.mxu0 0.0
        %300 = vmatpush2.msra.mxu0 0.0
        %301 = vmatprep.subr.mxu0 0.0
        %302 = vmatpush2.msra.mxu0 0.0
        %303 = vmatprep.subr.mxu0 0.0
        %304 = vmatpush2.msra.mxu0 0.0
        %305 = vmatprep.subr.mxu0 0.0
        %306 = vmatpush2.msra.mxu0 0.0
        %307 = vmatprep.subr.mxu0 0.0
        %308 = vmatpush2.msra.mxu0 0.0
        %309 = vmatprep.subr.mxu0 0.0
        %310 = vmatpush2.msra.mxu0 0.0
        %311 = vmatprep.subr.mxu0 0.0
        %312 = vmatpush2.msra.mxu0 0.0
        %313 = vmatprep.subr.mxu0 0.0
        %314 = vmatpush2.msra.mxu0 0.0
        %315 = vmatprep.subr.mxu0 0.0
        %316 = vmatpush2.msra.mxu0 0.0
        %317 = vmatprep.subr.mxu0 0.0
        %318 = vmatpush2.msra.mxu0 0.0
        %319 = vmatprep.subr.mxu0 0.0
        %320 = vmatpush2.msra.mxu0 0.0
        %321 = vmatprep.mubr.f32.mxu0 0.0
        %322 = vmatmul.mubr.f32.gmra.mxu0 %v234
        %v323 = vpop.f32.mrf.mxu0
        %v324 = vadd.f32 %v231, %v323
        %v325 = vpop.f32.mrf.mxu0
        %326 = vmatprep.mubr.f32.mxu0 0.0
        %327 = vmatmul.mubr.f32.gmra.mxu0 %v237
        %v328 = vpop.f32.mrf.mxu0
        %v329 = vadd.f32 %v231, %v328
        %v330 = vpop.f32.mrf.mxu0
        %331 = vmatprep.mubr.f32.mxu0 0.0
        %332 = vmatmul.mubr.f32.gmra.mxu0 %v240
        %v333 = vpop.f32.mrf.mxu0
        %v334 = vadd.f32 %v231, %v333
        %v335 = vpop.f32.mrf.mxu0
        %336 = vmatprep.mubr.f32.mxu0 0.0
        %337 = vmatmul.mubr.f32.gmra.mxu0 %v243
        %v338 = vpop.f32.mrf.mxu0
        %v339 = vadd.f32 %v231, %v338
        %v340 = vpop.f32.mrf.mxu0
        %341 = vmatprep.mubr.f32.mxu0 0.0
        %342 = vmatmul.mubr.f32.gmra.mxu0 %v246
        %v343 = vpop.f32.mrf.mxu0
        %v344 = vadd.f32 %v231, %v343
        %v345 = vpop.f32.mrf.mxu0
        %346 = vmatprep.mubr.f32.mxu0 0.0
        %347 = vmatmul.mubr.f32.gmra.mxu0 %v249
        %v348 = vpop.f32.mrf.mxu0
        %v349 = vadd.f32 %v231, %v348
        %v350 = vpop.f32.mrf.mxu0
        %351 = vmatprep.mubr.f32.mxu0 0.0
        %352 = vmatmul.mubr.f32.gmra.mxu0 %v252
        %v353 = vpop.f32.mrf.mxu0
        %v354 = vadd.f32 %v231, %v353
        %v355 = vpop.f32.mrf.mxu0
        %356 = vmatprep.mubr.f32.mxu0 0.0
        %357 = vmatmul.mubr.f32.gmra.mxu0 %v255
        %v358 = vpop.f32.mrf.mxu0
        %v359 = vadd.f32 %v231, %v358
        %v360 = vpop.f32.mrf.mxu0
        %361 = vdwg.mxu0
        %v362 = vtanh.pop %v324
        %v363 = vtanh.pop %v329
        %v364 = vtanh.pop %v334
        %v365 = vtanh.pop %v339
        %v366 = vtanh.pop %v344
        %v367 = vtanh.pop %v349
        %v368 = vtanh.pop %v354
        %v369 = vtanh.pop %v359
        %v370 = vld [vmem:[%s212] sm:$0xff]
        %v371 = vlaneseq
        %v372 = vand.u32 %v371, 127
        %373 = vset.pattern.permute.xlu0 0
        %374 = vperm.xlu0 %373, %v370
        %v375 = vpop.permute.xlu0 %374
        %vm376 = vcmp.eq.s32.totalorder %v372, %v375
        %v377 = vsel %vm376, 1, 0
        %v378 = vcvt.s32.f32 %v377
        %379 = vset.pattern.permute.xlu0 1
        %380 = vperm.xlu0 %379, %v370
        %v381 = vpop.permute.xlu0 %380
        %vm382 = vcmp.eq.s32.totalorder %v372, %v381
        %v383 = vsel %vm382, 1, 0
        %v384 = vcvt.s32.f32 %v383
        %385 = vrot.lane.b32.xlu0 %v370, 1
        %v386 = vpop.permute.xlu0 %385
        %v387 = vsub.s32 %v370, %v386
        %v388 = vadd.s32 %v387, 1
        %vm389 = vcmp.gt.s32.totalorder %v388, 1
        %v390 = vsel %vm389, %v388, 1
        %v391 = vcvt.s32.f32 %v390
        %v392 = vrcp.pop %v391
        %v393 = vmul.f32 1.0, %v392
        %vm394 = vcmp.ge.s32.totalorder %v372, %v375
        %vm395 = vcmp.le.s32.totalorder %v372, %v381
        %vm396 = vmand %vm394, %vm395
        %v397 = vsel %vm396, 1, 0
        %v398 = vcvt.s32.f32 %v397
        %400 = vset.pattern.permute.xlu0 1
        %401 = vperm.xlu0 %400, %v393
        %v402 = vpop.permute.xlu0 %401
        %v404 = vmul.f32 %v398, %v402
        %vm405 = vcmask 523264
        %v407 = vsel %vm405, %v378, 0
        %v410 = vsel %vm405, %v384, 0
        %v413 = vsel %vm405, %v404, 0
        %415 = vmatprep.subr.mxu0 0.0
        %416 = vmatpush1.msra.mxu0 0.0
        %417 = vmatprep.subr.mxu0 0.0
        %418 = vmatpush1.msra.mxu0 0.0
        %419 = vmatprep.subr.mxu0 0.0
        %420 = vmatpush1.msra.mxu0 0.0
        %421 = vmatprep.subr.mxu0 0.0
        %422 = vmatpush1.msra.mxu0 0.0
        %423 = vmatprep.subr.mxu0 0.0
        %424 = vmatpush1.msra.mxu0 0.0
        %425 = vmatprep.subr.mxu0 0.0
        %426 = vmatpush1.msra.mxu0 0.0
        %427 = vmatprep.subr.mxu0 0.0
        %428 = vmatpush1.msra.mxu0 0.0
        %429 = vmatprep.subr.mxu0 0.0
        %430 = vmatpush1.msra.mxu0 0.0
        %431 = vmatprep.subr.mxu0 0.0
        %432 = vmatpush1.msra.mxu0 %v369
        %433 = vmatprep.subr.mxu0 0.0
        %434 = vmatpush1.msra.mxu0 %v368
        %435 = vmatprep.subr.mxu0 0.0
        %436 = vmatpush1.msra.mxu0 %v367
        %437 = vmatprep.subr.mxu0 0.0
        %438 = vmatpush1.msra.mxu0 %v366
        %439 = vmatprep.subr.mxu0 0.0
        %440 = vmatpush1.msra.mxu0 %v365
        %441 = vmatprep.subr.mxu0 0.0
        %442 = vmatpush1.msra.mxu0 %v364
        %443 = vmatprep.subr.mxu0 0.0
        %444 = vmatpush1.msra.mxu0 %v363
        %445 = vmatprep.subr.mxu0 0.0
        %446 = vmatpush1.msra.mxu0 %v362
        %447 = vmatprep.subr.mxu0 0.0
        %448 = vmatpush2.msra.mxu0 0.0
        %449 = vmatprep.subr.mxu0 0.0
        %450 = vmatpush2.msra.mxu0 0.0
        %451 = vmatprep.subr.mxu0 0.0
        %452 = vmatpush2.msra.mxu0 0.0
        %453 = vmatprep.subr.mxu0 0.0
        %454 = vmatpush2.msra.mxu0 0.0
        %455 = vmatprep.subr.mxu0 0.0
        %456 = vmatpush2.msra.mxu0 0.0
        %457 = vmatprep.subr.mxu0 0.0
        %458 = vmatpush2.msra.mxu0 0.0
        %459 = vmatprep.subr.mxu0 0.0
        %460 = vmatpush2.msra.mxu0 0.0
        %461 = vmatprep.subr.mxu0 0.0
        %462 = vmatpush2.msra.mxu0 0.0
        %463 = vmatprep.subr.mxu0 0.0
        %464 = vmatpush2.msra.mxu0 0.0
        %465 = vmatprep.subr.mxu0 0.0
        %466 = vmatpush2.msra.mxu0 0.0
        %467 = vmatprep.subr.mxu0 0.0
        %468 = vmatpush2.msra.mxu0 0.0
        %469 = vmatprep.subr.mxu0 0.0
        %470 = vmatpush2.msra.mxu0 0.0
        %471 = vmatprep.subr.mxu0 0.0
        %472 = vmatpush2.msra.mxu0 0.0
        %473 = vmatprep.subr.mxu0 0.0
        %474 = vmatpush2.msra.mxu0 0.0
        %475 = vmatprep.subr.mxu0 0.0
        %476 = vmatpush2.msra.mxu0 0.0
        %477 = vmatprep.subr.mxu0 0.0
        %478 = vmatpush2.msra.mxu0 0.0
        %479 = vmatprep.mubr.f32.mxu0 0.0
        %480 = vmatmul.mubr.f32.gmra.mxu0 %v407
        %v481 = vpop.f32.mrf.mxu0
        %v482 = vadd.f32 0.0, %v481
        %v483 = vpop.f32.mrf.mxu0
        %484 = vmatprep.mubr.f32.mxu0 0.0
        %485 = vmatmul.mubr.f32.gmra.mxu0 %v410
        %v486 = vpop.f32.mrf.mxu0
        %v487 = vadd.f32 0.0, %v486
        %v488 = vpop.f32.mrf.mxu0
        %489 = vmatprep.mubr.f32.mxu0 0.0
        %490 = vmatmul.mubr.f32.gmra.mxu0 %v413
        %v491 = vpop.f32.mrf.mxu0
        %v492 = vadd.f32 0.0, %v491
        %v493 = vpop.f32.mrf.mxu0
        %494 = vdwg.mxu0
        %v495 = vlaneseq
        %v496 = vshrl.u32 %v495, 7
        %v497 = vsub.s32 2, %v496
        %v498 = vrot.slane %v482, %v497
        %v499 = vlaneseq
        %v500 = vshrl.u32 %v499, 7
        %v501 = vsub.s32 2, %v500
        %v502 = vrot.slane %v487, %v501
        %v503 = vlaneseq
        %v504 = vshrl.u32 %v503, 7
        %v505 = vsub.s32 2, %v504
        %v506 = vrot.slane %v492, %v505
        %v507 = vmul.f32 %v482, %v498
        %v508 = vmul.f32 %v487, %v502
        %v509 = vmul.f32 %v492, %v506
        %511 = vrot.lane.b32.xlu0 %v487, 32
        %v512 = vpop.permute.xlu0 %511
        %515 = vrot.lane.b32.xlu0 %v492, 64
        %v516 = vpop.permute.xlu0 %515
        %519 = vrot.lane.b32.xlu0 %v498, 96
        %v520 = vpop.permute.xlu0 %519
        %523 = vrot.lane.b32.xlu0 %v506, 32
        %v524 = vpop.permute.xlu0 %523
        %527 = vrot.lane.b32.xlu0 %v507, 64
        %v528 = vpop.permute.xlu0 %527
        %531 = vrot.lane.b32.xlu0 %v508, 96
        %v532 = vpop.permute.xlu0 %531
        %vm534 = vcmask 261120
        %v535 = vsel %vm534, %v482, %v512
        %v536 = vsel %vm405, %v535, %v516
        %vm537 = vcmask 785408
        %v538 = vsel %vm537, %v536, %v520
        %v539 = vsel %vm534, %v502, %v524
        %v540 = vsel %vm405, %v539, %v528
        %v541 = vsel %vm537, %v540, %v532
        %v542 = vld [vmem:[%s3] sm:$0xff]
        %v543 = vld [vmem:[%s3 + $0x8] sm:$0xff]
        %v544 = vld [vmem:[%s3 + $0x10] sm:$0xff]
        %v545 = vld [vmem:[%s3 + $0x18] sm:$0xff]
        %v546 = vld [vmem:[%s3 + $0x20] sm:$0xff]
        %v547 = vld [vmem:[%s3 + $0x28] sm:$0xff]
        %v548 = vld [vmem:[%s3 + $0x30] sm:$0xff]
        %v549 = vld [vmem:[%s3 + $0x38] sm:$0xff]
        %v550 = vld [vmem:[%s3 + $0x40] sm:$0xff]
        %v551 = vld [vmem:[%s3 + $0x48] sm:$0xff]
        %v552 = vld [vmem:[%s3 + $0x50] sm:$0xff]
        %v553 = vld [vmem:[%s3 + $0x58] sm:$0xff]
        %v554 = vld [vmem:[%s3 + $0x60] sm:$0xff]
        %v555 = vld [vmem:[%s3 + $0x68] sm:$0xff]
        %v556 = vld [vmem:[%s3 + $0x70] sm:$0xff]
        %v557 = vld [vmem:[%s3 + $0x78] sm:$0xff]
        %v558 = vld [vmem:[%s3 + $0x80] sm:$0xff]
        %v559 = vld [vmem:[%s3 + $0x88] sm:$0xff]
        %v560 = vld [vmem:[%s3 + $0x90] sm:$0xff]
        %v561 = vld [vmem:[%s3 + $0x98] sm:$0xff]
        %v562 = vld [vmem:[%s3 + $0xa0] sm:$0xff]
        %v563 = vld [vmem:[%s3 + $0xa8] sm:$0xff]
        %v564 = vld [vmem:[%s3 + $0xb0] sm:$0xff]
        %v565 = vld [vmem:[%s3 + $0xb8] sm:$0xff]
        %v566 = vld [vmem:[%s3 + $0xc0] sm:$0xff]
        %v567 = vld [vmem:[%s3 + $0xc8] sm:$0xff]
        %v568 = vld [vmem:[%s3 + $0xd0] sm:$0xff]
        %v569 = vld [vmem:[%s3 + $0xd8] sm:$0xff]
        %v570 = vld [vmem:[%s3 + $0xe0] sm:$0xff]
        %v571 = vld [vmem:[%s3 + $0xe8] sm:$0xff]
        %v572 = vld [vmem:[%s3 + $0xf0] sm:$0xff]
        %v573 = vld [vmem:[%s3 + $0xf8] sm:$0xff]
        %v574 = vld [vmem:[%s3 + $0x100] sm:$0xff]
        %v575 = vld [vmem:[%s3 + $0x108] sm:$0xff]
        %v576 = vld [vmem:[%s3 + $0x110] sm:$0xff]
        %v577 = vld [vmem:[%s3 + $0x118] sm:$0xff]
        %v578 = vld [vmem:[%s3 + $0x120] sm:$0x1]
        %v579 = vlaneseq
        %v580 = vshrl.u32 %v579, 7
        %v581 = vsub.s32 0, %v580
        %v582 = vrot.slane %v578, %v581
        %v584 = vsel %vm534, %v509, 0
        %586 = vmatprep.subr.mxu0 0.0
        %587 = vmatpush1.msra.mxu0 %v557
        %588 = vmatprep.subr.mxu0 0.0
        %589 = vmatpush1.msra.mxu0 %v556
        %590 = vmatprep.subr.mxu0 0.0
        %591 = vmatpush1.msra.mxu0 %v555
        %592 = vmatprep.subr.mxu0 0.0
        %593 = vmatpush1.msra.mxu0 %v554
        %594 = vmatprep.subr.mxu0 0.0
        %595 = vmatpush1.msra.mxu0 %v553
        %596 = vmatprep.subr.mxu0 0.0
        %597 = vmatpush1.msra.mxu0 %v552
        %598 = vmatprep.subr.mxu0 0.0
        %599 = vmatpush1.msra.mxu0 %v551
        %600 = vmatprep.subr.mxu0 0.0
        %601 = vmatpush1.msra.mxu0 %v550
        %602 = vmatprep.subr.mxu0 0.0
        %603 = vmatpush1.msra.mxu0 %v549
        %604 = vmatprep.subr.mxu0 0.0
        %605 = vmatpush1.msra.mxu0 %v548
        %606 = vmatprep.subr.mxu0 0.0
        %607 = vmatpush1.msra.mxu0 %v547
        %608 = vmatprep.subr.mxu0 0.0
        %609 = vmatpush1.msra.mxu0 %v546
        %610 = vmatprep.subr.mxu0 0.0
        %611 = vmatpush1.msra.mxu0 %v545
        %612 = vmatprep.subr.mxu0 0.0
        %613 = vmatpush1.msra.mxu0 %v544
        %614 = vmatprep.subr.mxu0 0.0
        %615 = vmatpush1.msra.mxu0 %v543
        %616 = vmatprep.subr.mxu0 0.0
        %617 = vmatpush1.msra.mxu0 %v542
        %618 = vmatprep.subr.mxu0 0.0
        %619 = vmatpush2.msra.mxu0 %v573
        %620 = vmatprep.subr.mxu0 0.0
        %621 = vmatpush2.msra.mxu0 %v572
        %622 = vmatprep.subr.mxu0 0.0
        %623 = vmatpush2.msra.mxu0 %v571
        %624 = vmatprep.subr.mxu0 0.0
        %625 = vmatpush2.msra.mxu0 %v570
        %626 = vmatprep.subr.mxu0 0.0
        %627 = vmatpush2.msra.mxu0 %v569
        %628 = vmatprep.subr.mxu0 0.0
        %629 = vmatpush2.msra.mxu0 %v568
        %630 = vmatprep.subr.mxu0 0.0
        %631 = vmatpush2.msra.mxu0 %v567
        %632 = vmatprep.subr.mxu0 0.0
        %633 = vmatpush2.msra.mxu0 %v566
        %634 = vmatprep.subr.mxu0 0.0
        %635 = vmatpush2.msra.mxu0 %v565
        %636 = vmatprep.subr.mxu0 0.0
        %637 = vmatpush2.msra.mxu0 %v564
        %638 = vmatprep.subr.mxu0 0.0
        %639 = vmatpush2.msra.mxu0 %v563
        %640 = vmatprep.subr.mxu0 0.0
        %641 = vmatpush2.msra.mxu0 %v562
        %642 = vmatprep.subr.mxu0 0.0
        %643 = vmatpush2.msra.mxu0 %v561
        %644 = vmatprep.subr.mxu0 0.0
        %645 = vmatpush2.msra.mxu0 %v560
        %646 = vmatprep.subr.mxu0 0.0
        %647 = vmatpush2.msra.mxu0 %v559
        %648 = vmatprep.subr.mxu0 0.0
        %649 = vmatpush2.msra.mxu0 %v558
        %650 = vmatprep.mubr.f32.mxu0 %v541
        %651 = vmatmul.mubr.f32.gmra.mxu0 %v538
        %v652 = vpop.f32.mrf.mxu0
        %v653 = vadd.f32 %v582, %v652
        %v654 = vpop.f32.mrf.mxu0
        %655 = vdwg.mxu0
        %656 = vmatprep.subr.mxu0 0.0
        %657 = vmatpush1.msra.mxu0 0.0
        %658 = vmatprep.subr.mxu0 0.0
        %659 = vmatpush1.msra.mxu0 0.0
        %660 = vmatprep.subr.mxu0 0.0
        %661 = vmatpush1.msra.mxu0 0.0
        %662 = vmatprep.subr.mxu0 0.0
        %663 = vmatpush1.msra.mxu0 0.0
        %664 = vmatprep.subr.mxu0 0.0
        %665 = vmatpush1.msra.mxu0 0.0
        %666 = vmatprep.subr.mxu0 0.0
        %667 = vmatpush1.msra.mxu0 0.0
        %668 = vmatprep.subr.mxu0 0.0
        %669 = vmatpush1.msra.mxu0 0.0
        %670 = vmatprep.subr.mxu0 0.0
        %671 = vmatpush1.msra.mxu0 0.0
        %672 = vmatprep.subr.mxu0 0.0
        %673 = vmatpush1.msra.mxu0 0.0
        %674 = vmatprep.subr.mxu0 0.0
        %675 = vmatpush1.msra.mxu0 0.0
        %676 = vmatprep.subr.mxu0 0.0
        %677 = vmatpush1.msra.mxu0 0.0
        %678 = vmatprep.subr.mxu0 0.0
        %679 = vmatpush1.msra.mxu0 0.0
        %680 = vmatprep.subr.mxu0 0.0
        %681 = vmatpush1.msra.mxu0 %v577
        %682 = vmatprep.subr.mxu0 0.0
        %683 = vmatpush1.msra.mxu0 %v576
        %684 = vmatprep.subr.mxu0 0.0
        %685 = vmatpush1.msra.mxu0 %v575
        %686 = vmatprep.subr.mxu0 0.0
        %687 = vmatpush1.msra.mxu0 %v574
        %688 = vmatprep.subr.mxu0 0.0
        %689 = vmatpush2.msra.mxu0 0.0
        %690 = vmatprep.subr.mxu0 0.0
        %691 = vmatpush2.msra.mxu0 0.0
        %692 = vmatprep.subr.mxu0 0.0
        %693 = vmatpush2.msra.mxu0 0.0
        %694 = vmatprep.subr.mxu0 0.0
        %695 = vmatpush2.msra.mxu0 0.0
        %696 = vmatprep.subr.mxu0 0.0
        %697 = vmatpush2.msra.mxu0 0.0
        %698 = vmatprep.subr.mxu0 0.0
        %699 = vmatpush2.msra.mxu0 0.0
        %700 = vmatprep.subr.mxu0 0.0
        %701 = vmatpush2.msra.mxu0 0.0
        %702 = vmatprep.subr.mxu0 0.0
        %703 = vmatpush2.msra.mxu0 0.0
        %704 = vmatprep.subr.mxu0 0.0
        %705 = vmatpush2.msra.mxu0 0.0
        %706 = vmatprep.subr.mxu0 0.0
        %707 = vmatpush2.msra.mxu0 0.0
        %708 = vmatprep.subr.mxu0 0.0
        %709 = vmatpush2.msra.mxu0 0.0
        %710 = vmatprep.subr.mxu0 0.0
        %711 = vmatpush2.msra.mxu0 0.0
        %712 = vmatprep.subr.mxu0 0.0
        %713 = vmatpush2.msra.mxu0 0.0
        %714 = vmatprep.subr.mxu0 0.0
        %715 = vmatpush2.msra.mxu0 0.0
        %716 = vmatprep.subr.mxu0 0.0
        %717 = vmatpush2.msra.mxu0 0.0
        %718 = vmatprep.subr.mxu0 0.0
        %719 = vmatpush2.msra.mxu0 0.0
        %720 = vmatprep.mubr.f32.mxu0 0.0
        %721 = vmatmul.mubr.f32.gmra.mxu0 %v584
        %v722 = vpop.f32.mrf.mxu0
        %v723 = vadd.f32 %v653, %v722
        %v724 = vpop.f32.mrf.mxu0
        %725 = vdwg.mxu0
        %v726 = vmax.f32 %v723, 0.0
        %v727 = vld [vmem:[%s3 + $0x121] sm:$0x1]
        %v728 = vlaneseq
        %v729 = vshrl.u32 %v728, 7
        %v730 = vsub.s32 0, %v729
        %v731 = vrot.slane %v727, %v730
        %v732 = vmul.f32 %v726, %v731
        %v733 = vsel %vm405, %v732, 0.0
        %734 = vadd.xlane.f32.xlu0 %v733
        %v735 = vpop.xlane.xlu0 %734
        %v736 = vld [vmem:[%s3 + $0x122] sm:$0x1]
        %v737 = vlaneseq
        %v738 = vshrl.u32 %v737, 7
        %v739 = vsub.s32 0, %v738
        %v740 = vrot.slane %v736, %v739
        %v741 = vadd.f32 %v735, %v740
        %743 = vrot.lane.b32.xlu0 %v732, 64
        %v744 = vpop.permute.xlu0 %743
        %v746 = vsel %vm405, %v744, 0.0
        %747 = vadd.xlane.f32.xlu0 %v746
        %v748 = vpop.xlane.xlu0 %747
        %v749 = vadd.f32 %v748, %v740
        %v750 = vlaneseq
        %v751 = vshrl.u32 %v750, 7
        %v752 = vsub.s32 2, %v751
        %v753 = vrot.slane %v741, %v752
        %v754 = vadd.f32 %v741, %v753
        %756 = vrot.lane.b32.xlu0 %v749, 127
        %v757 = vpop.permute.xlu0 %756
        %v759 = vadd.f32 %v754, %v757
        %vm760 = vcmp.eq.s32.totalorder %v372, 0
        %vm761 = vcmp.eq.s32.totalorder %v372, 1
        %763 = vset.pattern.permute.xlu0 0
        %764 = vperm.xlu0 %763, %v759
        %v765 = vpop.permute.xlu0 %764
        %v767 = vsel %vm761, %v765, 0.0
        %769 = vset.pattern.permute.xlu0 0
        %770 = vperm.xlu0 %769, %v741
        %v771 = vpop.permute.xlu0 %770
        %v773 = vsel %vm760, %v771, %v767
        %775 = vrot.lane.b32.xlu0 %v773, 96
        %v776 = vpop.permute.xlu0 %775
        %v778 = vsel %vm537, %v536, %v776
        %779 = vst [vmem:[%s203] sm:$0xff] %v778
        %s780 = sand.u32 %s120, 1
        %s781 = scalar_lea.sflag [#allocation3], %s780
        %s782 = sand.u32 %s120, 1
        %s783 = smul.addr %s782, 8
        %s784 = scalar_lea.vmem [#allocation2], %s783
        // Predicated region
        $region37: #{tpu_custom_call.1} parent=35 // pred_check
          %p785 = pneg %p130
        $region38: #{tpu_custom_call.1} parent=35 // pred_check_branch
          %787 = sbr.rel (%p785) target = $region40
        $region39: #{tpu_custom_call.1} parent=35 // pred_region
          %s789 = ssub.s32 128, 128
          %790 = vsyncadd %s781, %s789
          %s791 = smul.addr %s18, 128
          %s792 = scalar_lea.hbm %s4, %s791
          %s794 = sshll.u32 %s784, 4
          %s795 = int_to_ptr.vmem [resolvable:$true] %s794
          %797 = dma.vmem_to_hbm [thread:$0]  %s795, 128, %s792, %s781
        $region40: #{tpu_custom_call.1} parent=35 // pred_fallthru
          _
      $region36: #{tpu_custom_call.1} parent=5 // pred_fallthru
        _
      %p798 = scmp.le.s32.totalorder 2, %s13
      // Predicated region
      $region41: #{tpu_custom_call.1} parent=5 // pred_check
        %p799 = pneg %p798
      $region42: #{tpu_custom_call.1} parent=5 // pred_check_branch
        %801 = sbr.rel (%p799) target = $region44
      $region43: #{tpu_custom_call.1} parent=5 // pred_region
        %s802 = ssub.s32 %s13, 2
        // Predicated region
        $region45: #{tpu_custom_call.1} parent=43 // pred_check
          %p803 = pneg %p136
        $region46: #{tpu_custom_call.1} parent=43 // pred_check_branch
          %805 = sbr.rel (%p803) target = $region48
        $region47: #{tpu_custom_call.1} parent=43 // pred_region
          %s806 = sand.u32 %s121, 1
          %s807 = scalar_lea.sflag [#allocation3], %s806
          %s808 = sand.u32 %s121, 1
          %s809 = smul.addr %s808, 8
          %s810 = scalar_lea.vmem [#allocation2], %s809
          %811 = dma.done %s807, 128
        $region48: #{tpu_custom_call.1} parent=43 // pred_fallthru
          _
      $region44: #{tpu_custom_call.1} parent=5 // pred_fallthru
        _
    $region6: #{tpu_custom_call.1} parent=1 // loop_footer
      %s17 = sadd.s32 1, %s13
    $region7: #{tpu_custom_call.1} parent=1 // loop_footer_branch
      %12 = sbr.rel target = $region3
    $region8: #{tpu_custom_call.1} parent=1 // loop_exit
      _
    %812 = vsyncpa [#allocation3], 1
    %s813 = scalar_lea.sflag [#allocation3], 1
    %814 = vsyncpa %s813, 1

</llo_original>
